<compile_context>
chip_gen: v7x
topology: tpu7x:2x2x1
jax: 0.10.0
libtpu: 0.0.40
codegen_flags: <defaults>
</compile_context>

<pallas_src>
from functools import partial

import jax
import jax.numpy as jnp
from jax.experimental import pallas as pl
from jax.experimental.pallas import tpu as pltpu

LANE = 128  # lane width: last-dim blocks should be multiples of this


def _round_up(x, m):
    return ((x + m - 1) // m) * m


# ---------------------------------------------------------------------------
# Kernel 1: fused Q-network forward  out = relu(x @ W1 + b1) @ W2 + b2
#   - single grid axis over batch tiles ("parallel" -> megacore shards it)
#   - weights/biases stay VMEM-resident across batch tiles (index_map -> (0,0))
#   - second matmul / store are lane-dense: N is padded to a multiple of 128
#     in the wrapper, so no masked partial stores (vst.msk) on the output.
#   - fp32 MXU inputs kept for exactness at these tiny shapes (bf16 inputs are
#     a v6e-only throughput option once K/N grow).
# ---------------------------------------------------------------------------
def qf_forward_kernel(x_ref, w1_ref, b1_ref, w2_ref, b2_ref, o_ref):
    h = jnp.dot(x_ref[...], w1_ref[...], preferred_element_type=jnp.float32)
    h = jnp.maximum(h + b1_ref[...], 0.0)
    o = jnp.dot(h, w2_ref[...], preferred_element_type=jnp.float32)
    o_ref[...] = (o + b2_ref[...]).astype(o_ref.dtype)


@partial(jax.jit, static_argnames=("batch_tile",))
def qf_forward(x, params, *, batch_tile=512):
    w1, b1, w2, b2 = params["w1"], params["b1"], params["w2"], params["b2"]
    batch, obs_dim = x.shape
    hidden = w1.shape[1]
    act_dim = w2.shape[1]

    # --- lane-dense output head: pad N (act_dim) up to a multiple of 128 ---
    n_pad = _round_up(act_dim, LANE)
    if n_pad != act_dim:
        w2 = jnp.pad(w2, ((0, 0), (0, n_pad - act_dim)))
        b2 = jnp.pad(b2, ((0, 0), (0, n_pad - act_dim)))

    # --- batch tiling (single grid step at small RL-inference batches) ---
    tb = min(batch, batch_tile)
    m_pad = _round_up(batch, tb)
    if m_pad != batch:
        x = jnp.pad(x, ((0, m_pad - batch), (0, 0)))
    grid_m = m_pad // tb

    out = pl.pallas_call(
        qf_forward_kernel,
        out_shape=jax.ShapeDtypeStruct((m_pad, n_pad), jnp.float32),
        grid_spec=pltpu.PrefetchScalarGridSpec(
            num_scalar_prefetch=0,
            grid=(grid_m,),
            in_specs=[
                pl.BlockSpec((tb, obs_dim), lambda i: (i, 0)),       # x tile
                pl.BlockSpec((obs_dim, hidden), lambda i: (0, 0)),   # W1 resident
                pl.BlockSpec((1, hidden), lambda i: (0, 0)),         # b1 resident
                pl.BlockSpec((hidden, n_pad), lambda i: (0, 0)),     # W2 resident
                pl.BlockSpec((1, n_pad), lambda i: (0, 0)),          # b2 resident
            ],
            out_specs=pl.BlockSpec((tb, n_pad), lambda i: (i, 0)),
        ),
        compiler_params=pltpu.CompilerParams(
            dimension_semantics=("parallel",),
        ),
    )(x, w1, b1, w2, b2)

    return out[:batch, :act_dim]


# ---------------------------------------------------------------------------
# Kernel 2: sync_weight — ONE fused pallas_call for ALL parameters.
#   new_tgt_k = tau * src_k + (1 - tau) * tgt_k     for every parameter k
#   - tau is a Python-float closure constant (no SMEM operand / extra DMA)
#   - target buffers are aliased to the outputs (in-place polyak update)
# ---------------------------------------------------------------------------
def _make_soft_update_kernel(tau, n_params):
    tau = float(tau)

    def kernel(*refs):
        src_refs = refs[:n_params]
        tgt_refs = refs[n_params:2 * n_params]
        out_refs = refs[2 * n_params:]
        for s, t, o in zip(src_refs, tgt_refs, out_refs):
            o[...] = tau * s[...] + (1.0 - tau) * t[...]

    return kernel


@partial(jax.jit, static_argnames=("tau",), donate_argnums=(1,))
def sync_weight(qf_params, qf_target_params, *, tau):
    """Soft-update every parameter of qf_target toward qf (BaseAgent.sync_weight)."""
    keys = sorted(qf_params.keys())
    srcs = [qf_params[k] for k in keys]
    tgts = [qf_target_params[k] for k in keys]
    n = len(keys)

    outs = pl.pallas_call(
        _make_soft_update_kernel(tau, n),
        out_shape=[jax.ShapeDtypeStruct(t.shape, t.dtype) for t in tgts],
        # target param i is input (n + i); reuse its buffer for output i
        input_output_aliases={n + i: i for i in range(n)},
    )(*srcs, *tgts)

    return dict(zip(keys, outs))


# ---------------------------------------------------------------------------
# Deterministic parameter init (synthetic; no checkpoint loading)
# ---------------------------------------------------------------------------
def init_qf_params(key, obs_dim, hidden, act_dim):
    k1, k2, k3, k4 = jax.random.split(key, 4)
    scale1 = 1.0 / jnp.sqrt(obs_dim)
    scale2 = 1.0 / jnp.sqrt(hidden)
    return {
        "w1": jax.random.uniform(k1, (obs_dim, hidden), jnp.float32, -scale1, scale1),
        "b1": jax.random.uniform(k2, (1, hidden), jnp.float32, -scale1, scale1),
        "w2": jax.random.uniform(k3, (hidden, act_dim), jnp.float32, -scale2, scale2),
        "b2": jax.random.uniform(k4, (1, act_dim), jnp.float32, -scale2, scale2),
    }


if __name__ == "__main__":
    key = jax.random.PRNGKey(0)
    k_obs, k_qf, k_tgt = jax.random.split(key, 3)

    batch, obs_dim, hidden, act_dim = 8, 32, 128, 8
    update_tau = 0.005

    obs = jax.random.normal(k_obs, (batch, obs_dim), jnp.float32)
    qf_params = init_qf_params(k_qf, obs_dim, hidden, act_dim)
    qf_target_params = init_qf_params(k_tgt, obs_dim, hidden, act_dim)

    # --- Q-network forward pass (Pallas fused MLP kernel, lane-dense head) ---
    q_values = qf_forward(obs, qf_params)
    q_values = jax.block_until_ready(q_values)

    ref = jnp.maximum(obs @ qf_params["w1"] + qf_params["b1"], 0.0)
    ref = ref @ qf_params["w2"] + qf_params["b2"]
    assert q_values.shape == (batch, act_dim)
    assert jnp.allclose(q_values, ref, atol=1e-5, rtol=1e-5)

    # --- sync_weight (single fused Pallas soft-update, in-place on target) ---
    # Compute the reference BEFORE the call: target buffers are donated.
    expected_target = {
        k: update_tau * qf_params[k] + (1.0 - update_tau) * qf_target_params[k]
        for k in qf_params
    }

    new_target = sync_weight(qf_params, qf_target_params, tau=update_tau)
    new_target = jax.block_until_ready(new_target)

    for k in expected_target:
        assert jnp.allclose(new_target[k], expected_target[k], atol=1e-6, rtol=1e-6)

    print("KERNEL_OK")
</pallas_src>

<mosaic_0001>
module attributes {stable_mosaic.version = 11 : i64} {
  func.func @qf_forward_kernel(%arg0: i32, %arg1: memref<8x32xf32, #tpu.memory_space<vmem>>, %arg2: memref<32x128xf32, #tpu.memory_space<vmem>>, %arg3: memref<1x128xf32, #tpu.memory_space<vmem>>, %arg4: memref<128x128xf32, #tpu.memory_space<vmem>>, %arg5: memref<1x128xf32, #tpu.memory_space<vmem>>, %arg6: memref<8x128xf32, #tpu.memory_space<vmem>>) attributes {dimension_semantics = [#tpu.dimension_semantics<parallel>], iteration_bounds = array<i64: 1>, scalar_prefetch = 0 : i64, scratch_operands = 0 : i64, tpu.core_type = #tpu.core_type<tc>, window_params = [{transform_indices = @transform_0, window_bounds = array<i64: 8, 32>}, {pipeline_mode = #tpu.pipeline_mode<synchronous>, transform_indices = @transform_1, window_bounds = array<i64: 32, 128>}, {pipeline_mode = #tpu.pipeline_mode<synchronous>, transform_indices = @transform_2, window_bounds = array<i64: 1, 128>}, {pipeline_mode = #tpu.pipeline_mode<synchronous>, transform_indices = @transform_3, window_bounds = array<i64: 128, 128>}, {pipeline_mode = #tpu.pipeline_mode<synchronous>, transform_indices = @transform_4, window_bounds = array<i64: 1, 128>}, {transform_indices = @transform_5, window_bounds = array<i64: 8, 128>}]} {
    %c0 = arith.constant 0 : index
    %c0_0 = arith.constant 0 : index
    %0 = vector.load %arg1[%c0, %c0_0] : memref<8x32xf32, #tpu.memory_space<vmem>>, vector<8x32xf32>
    %c0_1 = arith.constant 0 : index
    %c0_2 = arith.constant 0 : index
    %1 = vector.load %arg2[%c0_1, %c0_2] : memref<32x128xf32, #tpu.memory_space<vmem>>, vector<32x128xf32>
    %cst = arith.constant dense<0.000000e+00> : vector<8x128xf32>
    %2 = tpu.matmul %0, %1, %cst {dimension_numbers = #tpu.dot_dimension_numbers<[1], [0], [0], [1], [0, 0, 1, 1], [], []>} : vector<8x32xf32>, vector<32x128xf32>, vector<8x128xf32> -> vector<8x128xf32>
    %c0_3 = arith.constant 0 : index
    %c0_4 = arith.constant 0 : index
    %3 = vector.load %arg3[%c0_3, %c0_4] : memref<1x128xf32, #tpu.memory_space<vmem>>, vector<1x128xf32>
    %4 = vector.broadcast %3 : vector<1x128xf32> to vector<8x128xf32>
    %5 = arith.addf %2, %4 : vector<8x128xf32>
    %cst_5 = arith.constant 0.000000e+00 : f32
    %6 = vector.broadcast %cst_5 : f32 to vector<8x128xf32>
    %7 = arith.maximumf %5, %6 : vector<8x128xf32>
    %c0_6 = arith.constant 0 : index
    %c0_7 = arith.constant 0 : index
    %8 = vector.load %arg4[%c0_6, %c0_7] : memref<128x128xf32, #tpu.memory_space<vmem>>, vector<128x128xf32>
    %cst_8 = arith.constant dense<0.000000e+00> : vector<8x128xf32>
    %9 = tpu.matmul %7, %8, %cst_8 {dimension_numbers = #tpu.dot_dimension_numbers<[1], [0], [0], [1], [0, 0, 1, 1], [], []>} : vector<8x128xf32>, vector<128x128xf32>, vector<8x128xf32> -> vector<8x128xf32>
    %c0_9 = arith.constant 0 : index
    %c0_10 = arith.constant 0 : index
    %10 = vector.load %arg5[%c0_9, %c0_10] : memref<1x128xf32, #tpu.memory_space<vmem>>, vector<1x128xf32>
    %11 = vector.broadcast %10 : vector<1x128xf32> to vector<8x128xf32>
    %12 = arith.addf %9, %11 : vector<8x128xf32>
    %c0_11 = arith.constant 0 : index
    %c0_12 = arith.constant 0 : index
    %13 = vector.load %arg6[%c0_11, %c0_12] : memref<8x128xf32, #tpu.memory_space<vmem>>, vector<8x128xf32>
    tpu.vector_store %arg6[%c0_11, %c0_12], %12 {strides = array<i32>} : memref<8x128xf32, #tpu.memory_space<vmem>>, vector<8x128xf32>,
    return
  }
  func.func @transform_0(%arg0: i32) -> (i32, i32) {
    %c0_i32 = arith.constant 0 : i32
    %c0_i32_0 = arith.constant 0 : i32
    return %arg0, %c0_i32 : i32, i32
  }
  func.func @transform_1(%arg0: i32) -> (i32, i32) {
    %c0_i32 = arith.constant 0 : i32
    %c0_i32_0 = arith.constant 0 : i32
    %c0_i32_1 = arith.constant 0 : i32
    return %c0_i32, %c0_i32_0 : i32, i32
  }
  func.func @transform_2(%arg0: i32) -> (i32, i32) {
    %c0_i32 = arith.constant 0 : i32
    %c0_i32_0 = arith.constant 0 : i32
    %c0_i32_1 = arith.constant 0 : i32
    return %c0_i32, %c0_i32_0 : i32, i32
  }
  func.func @transform_3(%arg0: i32) -> (i32, i32) {
    %c0_i32 = arith.constant 0 : i32
    %c0_i32_0 = arith.constant 0 : i32
    %c0_i32_1 = arith.constant 0 : i32
    return %c0_i32, %c0_i32_0 : i32, i32
  }
  func.func @transform_4(%arg0: i32) -> (i32, i32) {
    %c0_i32 = arith.constant 0 : i32
    %c0_i32_0 = arith.constant 0 : i32
    %c0_i32_1 = arith.constant 0 : i32
    return %c0_i32, %c0_i32_0 : i32, i32
  }
  func.func @transform_5(%arg0: i32) -> (i32, i32) {
    %c0_i32 = arith.constant 0 : i32
    %c0_i32_0 = arith.constant 0 : i32
    return %arg0, %c0_i32 : i32, i32
  }
}

</mosaic_0001>

<llo_original>
// kernel: qf_forward.1
$region0: #{qf_forward.1}
  #allocation0 [shape = 'u32[]', space=smem, size = 0x4, offset = 0x4, fixed_abs, tag = 'smem constant byte address 0x4 - core index']
  #allocation1 [shape = 'u32[144,128]{1,0:T(1,128)}', space=vmem, size = 0x12000, scoped, tag = 'internal scratch']
  %s0 = inlined_call_operand.vmem [shape: f32[8,32], index: 0, kind: input, shape index: {}]
  %s1 = inlined_call_operand.vmem [shape: f32[32,128], index: 1, kind: input, shape index: {}]
  %s2 = inlined_call_operand.vmem [shape: f32[1,128], index: 2, kind: input, shape index: {}]
  %s3 = inlined_call_operand.vmem [shape: f32[128,128], index: 3, kind: input, shape index: {}]
  %s4 = inlined_call_operand.vmem [shape: f32[1,128], index: 4, kind: input, shape index: {}]
  %s5 = inlined_call_operand.hbm [shape: f32[8,128], index: 5, kind: output, shape index: {}]
  %s6 = sld [smem:[#allocation0]]
  $region30: #{qf_forward.1} parent=0
    _
  %s8 = ssub.s32 1, %s6
  %s9 = scalar_select 0, %s8, %s6
  $region1: #{qf_forward.1} parent=0
    #allocation2 [shape = 'u8[4096]{0}', space=vmem, size = 0x1000, scoped, tag = 'output window, operand 0, single buffered']
    #allocation3 [shape = 's32[1]{0}', space=sflag, size = 0x4, scoped, tag = 'scoped memory for qf_forward.1']
    %10 = vsyncpa [#allocation3], 0
    // Predicated region
    $region2: #{qf_forward.1} parent=1 // pred_check
      _
    $region3: #{qf_forward.1} parent=1 // pred_check_branch
      %12 = sbr.rel (0) target = $region5
    $region4: #{qf_forward.1} parent=1 // pred_region
      _
    $region5: #{qf_forward.1} parent=1 // pred_fallthru
      _
    // Predicated region
    $region6: #{qf_forward.1} parent=1 // pred_check
      _
    $region7: #{qf_forward.1} parent=1 // pred_check_branch
      %14 = sbr.rel (0) target = $region9
    $region8: #{qf_forward.1} parent=1 // pred_region
      _
    $region9: #{qf_forward.1} parent=1 // pred_fallthru
      _
    // Predicated region
    $region10: #{qf_forward.1} parent=1 // pred_check
      _
    $region11: #{qf_forward.1} parent=1 // pred_check_branch
      %16 = sbr.rel (0) target = $region13
    $region12: #{qf_forward.1} parent=1 // pred_region
      _
    $region13: #{qf_forward.1} parent=1 // pred_fallthru
      _
    // Predicated region
    $region14: #{qf_forward.1} parent=1 // pred_check
      _
    $region15: #{qf_forward.1} parent=1 // pred_check_branch
      %18 = sbr.rel (0) target = $region17
    $region16: #{qf_forward.1} parent=1 // pred_region
      _
    $region17: #{qf_forward.1} parent=1 // pred_fallthru
      _
    // Predicated region
    $region18: #{qf_forward.1} parent=1 // pred_check
      _
    $region19: #{qf_forward.1} parent=1 // pred_check_branch
      %20 = sbr.rel (0) target = $region21
    $region20: #{qf_forward.1} parent=1 // pred_region
      _
    $region21: #{qf_forward.1} parent=1 // pred_fallthru
      _
    %v21 = vld [vmem:[%s0] sm:$0xff]
    %v22 = vld [vmem:[%s1] sm:$0xff]
    %v23 = vld [vmem:[%s1 + $0x8] sm:$0xff]
    %v24 = vld [vmem:[%s1 + $0x10] sm:$0xff]
    %v25 = vld [vmem:[%s1 + $0x18] sm:$0xff]
    %v26 = vld [vmem:[%s2] sm:$0x1]
    %v28 = vlaneseq
    %v29 = vshrl.u32 %v28, 7
    %v30 = vsub.s32 0, %v29
    %v31 = vrot.slane %v26, %v30
    %vm33 = vcmask 261120
    %v35 = vsel %vm33, %v21, 0
    %37 = vmatprep.subr.mxu0 0.0
    %38 = vmatpush1.msra.mxu0 %v22
    %39 = vmatprep.subr.mxu0 0.0
    %40 = vmatpush1.msra.mxu0 %v23
    %41 = vmatprep.subr.mxu0 0.0
    %42 = vmatpush1.msra.mxu0 %v24
    %43 = vmatprep.subr.mxu0 0.0
    %44 = vmatpush1.msra.mxu0 %v25
    %45 = vmatprep.subr.mxu0 0.0
    %46 = vmatpush1.msra.mxu0 0.0
    %47 = vmatprep.subr.mxu0 0.0
    %48 = vmatpush1.msra.mxu0 0.0
    %49 = vmatprep.subr.mxu0 0.0
    %50 = vmatpush1.msra.mxu0 0.0
    %51 = vmatprep.subr.mxu0 0.0
    %52 = vmatpush1.msra.mxu0 0.0
    %53 = vmatprep.subr.mxu0 0.0
    %54 = vmatpush1.msra.mxu0 0.0
    %55 = vmatprep.subr.mxu0 0.0
    %56 = vmatpush1.msra.mxu0 0.0
    %57 = vmatprep.subr.mxu0 0.0
    %58 = vmatpush1.msra.mxu0 0.0
    %59 = vmatprep.subr.mxu0 0.0
    %60 = vmatpush1.msra.mxu0 0.0
    %61 = vmatprep.subr.mxu0 0.0
    %62 = vmatpush1.msra.mxu0 0.0
    %63 = vmatprep.subr.mxu0 0.0
    %64 = vmatpush1.msra.mxu0 0.0
    %65 = vmatprep.subr.mxu0 0.0
    %66 = vmatpush1.msra.mxu0 0.0
    %67 = vmatprep.subr.mxu0 0.0
    %68 = vmatpush1.msra.mxu0 0.0
    %69 = vmatprep.subr.mxu0 0.0
    %70 = vmatpush1.msra.mxu0 0.0
    %71 = vmatprep.subr.mxu0 0.0
    %72 = vmatpush1.msra.mxu0 0.0
    %73 = vmatprep.subr.mxu0 0.0
    %74 = vmatpush1.msra.mxu0 0.0
    %75 = vmatprep.subr.mxu0 0.0
    %76 = vmatpush1.msra.mxu0 0.0
    %77 = vmatprep.subr.mxu0 0.0
    %78 = vmatpush1.msra.mxu0 0.0
    %79 = vmatprep.subr.mxu0 0.0
    %80 = vmatpush1.msra.mxu0 0.0
    %81 = vmatprep.subr.mxu0 0.0
    %82 = vmatpush1.msra.mxu0 0.0
    %83 = vmatprep.subr.mxu0 0.0
    %84 = vmatpush1.msra.mxu0 0.0
    %85 = vmatprep.subr.mxu0 0.0
    %86 = vmatpush1.msra.mxu0 0.0
    %87 = vmatprep.subr.mxu0 0.0
    %88 = vmatpush1.msra.mxu0 0.0
    %89 = vmatprep.subr.mxu0 0.0
    %90 = vmatpush1.msra.mxu0 0.0
    %91 = vmatprep.subr.mxu0 0.0
    %92 = vmatpush1.msra.mxu0 0.0
    %93 = vmatprep.subr.mxu0 0.0
    %94 = vmatpush1.msra.mxu0 0.0
    %95 = vmatprep.subr.mxu0 0.0
    %96 = vmatpush1.msra.mxu0 0.0
    %97 = vmatprep.subr.mxu0 0.0
    %98 = vmatpush1.msra.mxu0 0.0
    %99 = vmatprep.subr.mxu0 0.0
    %100 = vmatpush1.msra.mxu0 0.0
    %101 = vmatprep.mubr.f32.mxu0 0.0
    %102 = vmatmul.mubr.f32.gmra.mrb[0].mxu0 %v35
    %v103 = vpop.f32.mrb[0].mxu0
    %v104 = vadd.f32 %v31, %v103
    %v105 = vpop.f32.mrb[0].mxu0
    %106 = vdwg.mxu0
    %v107 = vmax.f32 %v104, 0.0
    %v108 = vld [vmem:[%s3] sm:$0xff]
    %v109 = vld [vmem:[%s3 + $0x8] sm:$0xff]
    %v110 = vld [vmem:[%s3 + $0x10] sm:$0xff]
    %v111 = vld [vmem:[%s3 + $0x18] sm:$0xff]
    %v112 = vld [vmem:[%s3 + $0x20] sm:$0xff]
    %v113 = vld [vmem:[%s3 + $0x28] sm:$0xff]
    %v114 = vld [vmem:[%s3 + $0x30] sm:$0xff]
    %v115 = vld [vmem:[%s3 + $0x38] sm:$0xff]
    %v116 = vld [vmem:[%s3 + $0x40] sm:$0xff]
    %v117 = vld [vmem:[%s3 + $0x48] sm:$0xff]
    %v118 = vld [vmem:[%s3 + $0x50] sm:$0xff]
    %v119 = vld [vmem:[%s3 + $0x58] sm:$0xff]
    %v120 = vld [vmem:[%s3 + $0x60] sm:$0xff]
    %v121 = vld [vmem:[%s3 + $0x68] sm:$0xff]
    %v122 = vld [vmem:[%s3 + $0x70] sm:$0xff]
    %v123 = vld [vmem:[%s3 + $0x78] sm:$0xff]
    %v124 = vld [vmem:[%s4] sm:$0x1]
    %v126 = vlaneseq
    %v127 = vshrl.u32 %v126, 7
    %v128 = vsub.s32 0, %v127
    %v129 = vrot.slane %v124, %v128
    %131 = vmatprep.subr.mxu0 0.0
    %132 = vmatpush1.msra.mxu0 %v108
    %133 = vmatprep.subr.mxu0 0.0
    %134 = vmatpush1.msra.mxu0 %v109
    %135 = vmatprep.subr.mxu0 0.0
    %136 = vmatpush1.msra.mxu0 %v110
    %137 = vmatprep.subr.mxu0 0.0
    %138 = vmatpush1.msra.mxu0 %v111
    %139 = vmatprep.subr.mxu0 0.0
    %140 = vmatpush1.msra.mxu0 %v112
    %141 = vmatprep.subr.mxu0 0.0
    %142 = vmatpush1.msra.mxu0 %v113
    %143 = vmatprep.subr.mxu0 0.0
    %144 = vmatpush1.msra.mxu0 %v114
    %145 = vmatprep.subr.mxu0 0.0
    %146 = vmatpush1.msra.mxu0 %v115
    %147 = vmatprep.subr.mxu0 0.0
    %148 = vmatpush1.msra.mxu0 %v116
    %149 = vmatprep.subr.mxu0 0.0
    %150 = vmatpush1.msra.mxu0 %v117
    %151 = vmatprep.subr.mxu0 0.0
    %152 = vmatpush1.msra.mxu0 %v118
    %153 = vmatprep.subr.mxu0 0.0
    %154 = vmatpush1.msra.mxu0 %v119
    %155 = vmatprep.subr.mxu0 0.0
    %156 = vmatpush1.msra.mxu0 %v120
    %157 = vmatprep.subr.mxu0 0.0
    %158 = vmatpush1.msra.mxu0 %v121
    %159 = vmatprep.subr.mxu0 0.0
    %160 = vmatpush1.msra.mxu0 %v122
    %161 = vmatprep.subr.mxu0 0.0
    %162 = vmatpush1.msra.mxu0 %v123
    %163 = vmatprep.subr.mxu0 0.0
    %164 = vmatpush1.msra.mxu0 0.0
    %165 = vmatprep.subr.mxu0 0.0
    %166 = vmatpush1.msra.mxu0 0.0
    %167 = vmatprep.subr.mxu0 0.0
    %168 = vmatpush1.msra.mxu0 0.0
    %169 = vmatprep.subr.mxu0 0.0
    %170 = vmatpush1.msra.mxu0 0.0
    %171 = vmatprep.subr.mxu0 0.0
    %172 = vmatpush1.msra.mxu0 0.0
    %173 = vmatprep.subr.mxu0 0.0
    %174 = vmatpush1.msra.mxu0 0.0
    %175 = vmatprep.subr.mxu0 0.0
    %176 = vmatpush1.msra.mxu0 0.0
    %177 = vmatprep.subr.mxu0 0.0
    %178 = vmatpush1.msra.mxu0 0.0
    %179 = vmatprep.subr.mxu0 0.0
    %180 = vmatpush1.msra.mxu0 0.0
    %181 = vmatprep.subr.mxu0 0.0
    %182 = vmatpush1.msra.mxu0 0.0
    %183 = vmatprep.subr.mxu0 0.0
    %184 = vmatpush1.msra.mxu0 0.0
    %185 = vmatprep.subr.mxu0 0.0
    %186 = vmatpush1.msra.mxu0 0.0
    %187 = vmatprep.subr.mxu0 0.0
    %188 = vmatpush1.msra.mxu0 0.0
    %189 = vmatprep.subr.mxu0 0.0
    %190 = vmatpush1.msra.mxu0 0.0
    %191 = vmatprep.subr.mxu0 0.0
    %192 = vmatpush1.msra.mxu0 0.0
    %193 = vmatprep.subr.mxu0 0.0
    %194 = vmatpush1.msra.mxu0 0.0
    %195 = vmatprep.mubr.f32.mxu0 0.0
    %196 = vmatmul.mubr.f32.gmra.mrb[0].mxu0 %v107
    %v197 = vpop.f32.mrb[0].mxu0
    %v198 = vadd.f32 %v129, %v197
    %v199 = vpop.f32.mrb[0].mxu0
    %200 = vdwg.mxu0
    %201 = vst [vmem:[#allocation2] sm:$0xff] %v198
    // Predicated region
    $region22: #{qf_forward.1} parent=1 // pred_check
      _
    $region23: #{qf_forward.1} parent=1 // pred_check_branch
      %203 = sbr.rel (0) target = $region25
    $region24: #{qf_forward.1} parent=1 // pred_region
      %s205 = ssub.s32 128, 128
      %206 = vsyncadd [#allocation3], %s205
      %s208 = sshll.u32 [#allocation2], 4
      %s209 = int_to_ptr.vmem [resolvable:$true] %s208
      %211 = dma.vmem_to_hbm [thread:$0]  %s209, 128, %s5, [#allocation3]
    $region25: #{qf_forward.1} parent=1 // pred_fallthru
      _
    // Predicated region
    $region26: #{qf_forward.1} parent=1 // pred_check
      _
    $region27: #{qf_forward.1} parent=1 // pred_check_branch
      %213 = sbr.rel (0) target = $region29
    $region28: #{qf_forward.1} parent=1 // pred_region
      %214 = dma.done [#allocation3], 128
    $region29: #{qf_forward.1} parent=1 // pred_fallthru
      _
    %215 = vsyncpa [#allocation3], 1

</llo_original>
